<compile_context>
chip_gen: v5e
topology: v5e:2x2
jax: 0.10.0
libtpu: 0.0.40
codegen_flags: <defaults>
</compile_context>

<pallas_src>
import functools

import jax
import jax.numpy as jnp
import numpy as np
from jax.experimental import pallas as pl
from jax.experimental.pallas import tpu as pltpu


def _round_up(x, m):
    return (x + m - 1) // m * m


def _residual_block_kernel(x_ref, w1_ref, b1_ref, w2_ref, b2_ref, mask_ref,
                           out_ref, col_ref, y_ref, *, Wp, lead, yoff):
    """Fused residual block for one sample (channels-on-sublanes layout).

    x_ref   : (Cp, LX)   f32   flat zero-padded image; real padded-grid data
                               occupies lanes [lead, lead + P)
    w*_ref  : (Cp, 9*Cp) bf16  packed conv weights [o, t*Cp + i], t = ky*3+kx
    b*_ref  : (Cp, 1)    f32   conv biases (zero rows for padded channels)
    mask_ref: (1, LOUT)  f32   1.0 at interior padded-grid lanes, else 0.0
    out_ref : (Cp, LOUT) f32   output on the padded grid (ring/slack = junk)
    col_ref : (9*Cp, LOUT) f32 VMEM scratch: im2col matrix
    y_ref   : (Cp, LX)   f32   VMEM scratch: conv1 output with zero margins
    """
    Cp, LOUT = out_ref.shape
    # Flat lane offset of each 3x3 tap relative to an output pixel.
    offs = [(ky - 1) * Wp + (kx - 1) for ky in range(3) for kx in range(3)]

    def build_cols(src_ref, base):
        # Stack the 9 lane-shifted (Cp, LOUT) tap windows on the sublane axis.
        for t, off in enumerate(offs):
            s = base + off                              # static, in-bounds
            col_ref[t * Cp:(t + 1) * Cp, :] = src_ref[:, s:s + LOUT]

    def conv(w_ref, b_ref):
        # One MXU contraction per conv: (Cp, 9*Cp) @ (9*Cp, LOUT),
        # bf16 operands, f32 accumulation (single pass, default precision).
        cols = col_ref[...].astype(jnp.bfloat16)
        acc = jnp.dot(w_ref[...], cols, preferred_element_type=jnp.float32)
        return acc + b_ref[...]                         # (Cp,1) broadcasts

    # conv1 + bias + relu; zero the padded-grid ring (and lane slack) so
    # conv2 sees exactly the zero padding the PyTorch module applies.
    build_cols(x_ref, lead)
    y = jnp.maximum(conv(w1_ref, b1_ref), 0.0) * mask_ref[...]

    # Stage y in VMEM with zeroed margins: conv2's tap windows become plain
    # vector loads, and no junk can leak in from uninitialized scratch.
    y_ref[:, :yoff] = jnp.zeros((Cp, yoff), jnp.float32)
    y_ref[:, yoff + LOUT:] = jnp.zeros((Cp, y_ref.shape[1] - yoff - LOUT),
                                       jnp.float32)
    y_ref[:, yoff:yoff + LOUT] = y

    # conv2 + bias, residual add, final relu.  Non-interior lanes hold junk
    # values and are dropped by the wrapper.
    build_cols(y_ref, yoff)
    x_res = x_ref[:, lead:lead + LOUT]                  # aligned slice
    out_ref[...] = jnp.maximum(x_res + conv(w2_ref, b2_ref),
                               0.0).astype(out_ref.dtype)


def residual_block(x_nchw, w1, b1, w2, b2):
    """x_nchw: (N, C, H, W); w*: (C, C, 3, 3) PyTorch OIHW; b*: (C,)."""
    N, C, H, W = x_nchw.shape
    Hp, Wp = H + 2, W + 2
    P = Hp * Wp
    Cp = _round_up(C, 8)                    # full f32 sublane groups
    LOUT = _round_up(P, 128)                # lane-dense, unmasked stores
    LEAD = 128                              # aligned residual slice; >= Wp+1
    assert Wp + 1 <= LEAD, "spatial width too large for fixed lane margin"
    LX = LEAD + _round_up(LOUT + Wp + 2, 128)   # covers every tap read

    # Channel pad (C -> Cp) + spatial zero-pad in one pass, flatten the padded
    # grid onto the lane axis, then add flat lead/tail zero margins.
    # TODO(synk): at realistic sizes fuse this prep into the kernel via DMA.
    x_sp = jnp.pad(x_nchw.astype(jnp.float32),
                   ((0, 0), (0, Cp - C), (1, 1), (1, 1))).reshape(N, Cp, P)
    x_slab = jnp.pad(x_sp, ((0, 0), (0, 0), (LEAD, LX - LEAD - P)))

    # Pack weights for the im2col contraction: [o, t*Cp + i], t = ky*3 + kx,
    # with zero rows/cols for the padded channels; bf16 operands for the MXU.
    def pack_w(w):
        w_oti = jnp.transpose(w, (0, 2, 3, 1)).reshape(C, 9, C)
        w_pad = jnp.pad(w_oti, ((0, Cp - C), (0, 0), (0, Cp - C)))
        return w_pad.reshape(Cp, 9 * Cp).astype(jnp.bfloat16)

    w1p, w2p = pack_w(w1), pack_w(w2)
    b1p = jnp.pad(b1.astype(jnp.float32), (0, Cp - C)).reshape(Cp, 1)
    b2p = jnp.pad(b2.astype(jnp.float32), (0, Cp - C)).reshape(Cp, 1)

    # Interior mask over the padded grid (1 = real pixel, 0 = padding ring /
    # lane slack).
    rows = jnp.arange(Hp).reshape(Hp, 1)
    cols = jnp.arange(Wp).reshape(1, Wp)
    interior = ((rows >= 1) & (rows <= H) & (cols >= 1) & (cols <= W))
    mask = jnp.pad(interior.astype(jnp.float32).reshape(1, P),
                   ((0, 0), (0, LOUT - P)))

    kernel = functools.partial(_residual_block_kernel,
                               Wp=Wp, lead=LEAD, yoff=LEAD)

    out_slab = pl.pallas_call(
        kernel,
        out_shape=jax.ShapeDtypeStruct((N, Cp, LOUT), jnp.float32),
        grid_spec=pltpu.PrefetchScalarGridSpec(
            num_scalar_prefetch=0,
            grid=(N,),
            in_specs=[
                pl.BlockSpec((None, Cp, LX), lambda n: (n, 0, 0)),
                pl.BlockSpec((Cp, 9 * Cp), lambda n: (0, 0)),
                pl.BlockSpec((Cp, 1), lambda n: (0, 0)),
                pl.BlockSpec((Cp, 9 * Cp), lambda n: (0, 0)),
                pl.BlockSpec((Cp, 1), lambda n: (0, 0)),
                pl.BlockSpec((1, LOUT), lambda n: (0, 0)),
            ],
            out_specs=pl.BlockSpec((None, Cp, LOUT), lambda n: (n, 0, 0)),
            scratch_shapes=[
                pltpu.VMEM((9 * Cp, LOUT), jnp.float32),   # im2col matrix
                pltpu.VMEM((Cp, LX), jnp.float32),         # staged conv1 out
            ],
        ),
        compiler_params=pltpu.CompilerParams(
            dimension_semantics=("parallel",)),
    )(x_slab, w1p, b1p, w2p, b2p, mask)

    # Back to NCHW: drop padded channels, lane slack, and the padding ring.
    out = out_slab[:, :C, :P].reshape(N, C, Hp, Wp)[:, :, 1:H + 1, 1:W + 1]
    return out.astype(x_nchw.dtype)


def _reference(x, w1, b1, w2, b2):
    """Pure-JAX reference matching the PyTorch forward exactly (NCHW, f32)."""
    dn = jax.lax.conv_dimension_numbers(x.shape, w1.shape,
                                        ("NCHW", "OIHW", "NCHW"))
    prec = jax.lax.Precision.HIGHEST
    y = jax.lax.conv_general_dilated(x, w1, (1, 1), ((1, 1), (1, 1)),
                                     dimension_numbers=dn, precision=prec)
    y = jax.nn.relu(y + b1.reshape(1, -1, 1, 1))
    y = jax.lax.conv_general_dilated(y, w2, (1, 1), ((1, 1), (1, 1)),
                                     dimension_numbers=dn, precision=prec)
    y = y + b2.reshape(1, -1, 1, 1)
    return jax.nn.relu(x + y)


if __name__ == "__main__":
    N, C, H, W = 2, 4, 16, 16

    key = jax.random.PRNGKey(0)
    kx, kw1, kb1, kw2, kb2 = jax.random.split(key, 5)

    x = jax.random.normal(kx, (N, C, H, W), dtype=jnp.float32)

    # Deterministic init mimicking PyTorch Conv2d default: U(-k, k),
    # k = 1/sqrt(Cin*kh*kw).
    k = 1.0 / np.sqrt(C * 3 * 3)
    w1 = jax.random.uniform(kw1, (C, C, 3, 3), jnp.float32, -k, k)
    b1 = jax.random.uniform(kb1, (C,), jnp.float32, -k, k)
    w2 = jax.random.uniform(kw2, (C, C, 3, 3), jnp.float32, -k, k)
    b2 = jax.random.uniform(kb2, (C,), jnp.float32, -k, k)

    out = jax.block_until_ready(residual_block(x, w1, b1, w2, b2))
    ref = jax.block_until_ready(_reference(x, w1, b1, w2, b2))

    assert out.shape == (N, C, H, W) and out.dtype == jnp.float32
    # bf16 MXU operands (single pass) vs an f32-HIGHEST reference ->
    # bf16-level tolerance.
    np.testing.assert_allclose(np.asarray(out), np.asarray(ref),
                               rtol=3e-2, atol=3e-2)
    print("KERNEL_OK")
</pallas_src>

<mosaic_0001>
module attributes {stable_mosaic.version = 11 : i64} {
  func.func @_residual_block_kernel(%arg0: i32, %arg1: memref<1x8x640xf32, #tpu.memory_space<vmem>>, %arg2: memref<8x72xbf16, #tpu.memory_space<vmem>>, %arg3: memref<8x1xf32, #tpu.memory_space<vmem>>, %arg4: memref<8x72xbf16, #tpu.memory_space<vmem>>, %arg5: memref<8x1xf32, #tpu.memory_space<vmem>>, %arg6: memref<1x384xf32, #tpu.memory_space<vmem>>, %arg7: memref<1x8x384xf32, #tpu.memory_space<vmem>>, %arg8: memref<72x384xf32, #tpu.memory_space<vmem>>, %arg9: memref<8x640xf32, #tpu.memory_space<vmem>>) attributes {dimension_semantics = [#tpu.dimension_semantics<parallel>], iteration_bounds = array<i64: 2>, scalar_prefetch = 0 : i64, scratch_operands = 2 : i64, tpu.core_type = #tpu.core_type<tc>, window_params = [{transform_indices = @transform_0, window_bounds = array<i64: 1, 8, 640>}, {pipeline_mode = #tpu.pipeline_mode<synchronous>, transform_indices = @transform_1, window_bounds = array<i64: 8, 72>}, {pipeline_mode = #tpu.pipeline_mode<synchronous>, transform_indices = @transform_2, window_bounds = array<i64: 8, 1>}, {pipeline_mode = #tpu.pipeline_mode<synchronous>, transform_indices = @transform_3, window_bounds = array<i64: 8, 72>}, {pipeline_mode = #tpu.pipeline_mode<synchronous>, transform_indices = @transform_4, window_bounds = array<i64: 8, 1>}, {pipeline_mode = #tpu.pipeline_mode<synchronous>, transform_indices = @transform_5, window_bounds = array<i64: 1, 384>}, {transform_indices = @transform_6, window_bounds = array<i64: 1, 8, 384>}]} {
    %c0 = arith.constant 0 : index
    %c0_0 = arith.constant 0 : index
    %c109 = arith.constant 109 : index
    %0 = vector.load %arg1[%c0, %c0_0, %c109] : memref<1x8x640xf32, #tpu.memory_space<vmem>>, vector<1x8x384xf32>
    %1 = vector.shape_cast %0 : vector<1x8x384xf32> to vector<8x384xf32>
    %c0_1 = arith.constant 0 : index
    %c0_2 = arith.constant 0 : index
    %2 = vector.load %arg8[%c0_1, %c0_2] : memref<72x384xf32, #tpu.memory_space<vmem>>, vector<8x384xf32>
    tpu.vector_store %arg8[%c0_1, %c0_2], %1 {strides = array<i32>} : memref<72x384xf32, #tpu.memory_space<vmem>>, vector<8x384xf32>,
    %c0_3 = arith.constant 0 : index
    %c0_4 = arith.constant 0 : index
    %c110 = arith.constant 110 : index
    %3 = vector.load %arg1[%c0_3, %c0_4, %c110] : memref<1x8x640xf32, #tpu.memory_space<vmem>>, vector<1x8x384xf32>
    %4 = vector.shape_cast %3 : vector<1x8x384xf32> to vector<8x384xf32>
    %c8 = arith.constant 8 : index
    %c0_5 = arith.constant 0 : index
    %5 = vector.load %arg8[%c8, %c0_5] : memref<72x384xf32, #tpu.memory_space<vmem>>, vector<8x384xf32>
    tpu.vector_store %arg8[%c8, %c0_5], %4 {strides = array<i32>} : memref<72x384xf32, #tpu.memory_space<vmem>>, vector<8x384xf32>,
    %c0_6 = arith.constant 0 : index
    %c0_7 = arith.constant 0 : index
    %c111 = arith.constant 111 : index
    %6 = vector.load %arg1[%c0_6, %c0_7, %c111] : memref<1x8x640xf32, #tpu.memory_space<vmem>>, vector<1x8x384xf32>
    %7 = vector.shape_cast %6 : vector<1x8x384xf32> to vector<8x384xf32>
    %c16 = arith.constant 16 : index
    %c0_8 = arith.constant 0 : index
    %8 = vector.load %arg8[%c16, %c0_8] : memref<72x384xf32, #tpu.memory_space<vmem>>, vector<8x384xf32>
    tpu.vector_store %arg8[%c16, %c0_8], %7 {strides = array<i32>} : memref<72x384xf32, #tpu.memory_space<vmem>>, vector<8x384xf32>,
    %c0_9 = arith.constant 0 : index
    %c0_10 = arith.constant 0 : index
    %c127 = arith.constant 127 : index
    %9 = vector.load %arg1[%c0_9, %c0_10, %c127] : memref<1x8x640xf32, #tpu.memory_space<vmem>>, vector<1x8x384xf32>
    %10 = vector.shape_cast %9 : vector<1x8x384xf32> to vector<8x384xf32>
    %c24 = arith.constant 24 : index
    %c0_11 = arith.constant 0 : index
    %11 = vector.load %arg8[%c24, %c0_11] : memref<72x384xf32, #tpu.memory_space<vmem>>, vector<8x384xf32>
    tpu.vector_store %arg8[%c24, %c0_11], %10 {strides = array<i32>} : memref<72x384xf32, #tpu.memory_space<vmem>>, vector<8x384xf32>,
    %c0_12 = arith.constant 0 : index
    %c0_13 = arith.constant 0 : index
    %c128 = arith.constant 128 : index
    %12 = vector.load %arg1[%c0_12, %c0_13, %c128] : memref<1x8x640xf32, #tpu.memory_space<vmem>>, vector<1x8x384xf32>
    %13 = vector.shape_cast %12 : vector<1x8x384xf32> to vector<8x384xf32>
    %c32 = arith.constant 32 : index
    %c0_14 = arith.constant 0 : index
    %14 = vector.load %arg8[%c32, %c0_14] : memref<72x384xf32, #tpu.memory_space<vmem>>, vector<8x384xf32>
    tpu.vector_store %arg8[%c32, %c0_14], %13 {strides = array<i32>} : memref<72x384xf32, #tpu.memory_space<vmem>>, vector<8x384xf32>,
    %c0_15 = arith.constant 0 : index
    %c0_16 = arith.constant 0 : index
    %c129 = arith.constant 129 : index
    %15 = vector.load %arg1[%c0_15, %c0_16, %c129] : memref<1x8x640xf32, #tpu.memory_space<vmem>>, vector<1x8x384xf32>
    %16 = vector.shape_cast %15 : vector<1x8x384xf32> to vector<8x384xf32>
    %c40 = arith.constant 40 : index
    %c0_17 = arith.constant 0 : index
    %17 = vector.load %arg8[%c40, %c0_17] : memref<72x384xf32, #tpu.memory_space<vmem>>, vector<8x384xf32>
    tpu.vector_store %arg8[%c40, %c0_17], %16 {strides = array<i32>} : memref<72x384xf32, #tpu.memory_space<vmem>>, vector<8x384xf32>,
    %c0_18 = arith.constant 0 : index
    %c0_19 = arith.constant 0 : index
    %c145 = arith.constant 145 : index
    %18 = vector.load %arg1[%c0_18, %c0_19, %c145] : memref<1x8x640xf32, #tpu.memory_space<vmem>>, vector<1x8x384xf32>
    %19 = vector.shape_cast %18 : vector<1x8x384xf32> to vector<8x384xf32>
    %c48 = arith.constant 48 : index
    %c0_20 = arith.constant 0 : index
    %20 = vector.load %arg8[%c48, %c0_20] : memref<72x384xf32, #tpu.memory_space<vmem>>, vector<8x384xf32>
    tpu.vector_store %arg8[%c48, %c0_20], %19 {strides = array<i32>} : memref<72x384xf32, #tpu.memory_space<vmem>>, vector<8x384xf32>,
    %c0_21 = arith.constant 0 : index
    %c0_22 = arith.constant 0 : index
    %c146 = arith.constant 146 : index
    %21 = vector.load %arg1[%c0_21, %c0_22, %c146] : memref<1x8x640xf32, #tpu.memory_space<vmem>>, vector<1x8x384xf32>
    %22 = vector.shape_cast %21 : vector<1x8x384xf32> to vector<8x384xf32>
    %c56 = arith.constant 56 : index
    %c0_23 = arith.constant 0 : index
    %23 = vector.load %arg8[%c56, %c0_23] : memref<72x384xf32, #tpu.memory_space<vmem>>, vector<8x384xf32>
    tpu.vector_store %arg8[%c56, %c0_23], %22 {strides = array<i32>} : memref<72x384xf32, #tpu.memory_space<vmem>>, vector<8x384xf32>,
    %c0_24 = arith.constant 0 : index
    %c0_25 = arith.constant 0 : index
    %c147 = arith.constant 147 : index
    %24 = vector.load %arg1[%c0_24, %c0_25, %c147] : memref<1x8x640xf32, #tpu.memory_space<vmem>>, vector<1x8x384xf32>
    %25 = vector.shape_cast %24 : vector<1x8x384xf32> to vector<8x384xf32>
    %c64 = arith.constant 64 : index
    %c0_26 = arith.constant 0 : index
    %26 = vector.load %arg8[%c64, %c0_26] : memref<72x384xf32, #tpu.memory_space<vmem>>, vector<8x384xf32>
    tpu.vector_store %arg8[%c64, %c0_26], %25 {strides = array<i32>} : memref<72x384xf32, #tpu.memory_space<vmem>>, vector<8x384xf32>,
    %c0_27 = arith.constant 0 : index
    %c0_28 = arith.constant 0 : index
    %27 = vector.load %arg8[%c0_27, %c0_28] : memref<72x384xf32, #tpu.memory_space<vmem>>, vector<72x384xf32>
    %28 = arith.truncf %27 : vector<72x384xf32> to vector<72x384xbf16>
    %c0_29 = arith.constant 0 : index
    %c0_30 = arith.constant 0 : index
    %29 = vector.load %arg2[%c0_29, %c0_30] : memref<8x72xbf16, #tpu.memory_space<vmem>>, vector<8x72xbf16>
    %cst = arith.constant dense<0.000000e+00> : vector<8x384xf32>
    %30 = tpu.matmul %29, %28, %cst {dimension_numbers = #tpu.dot_dimension_numbers<[1], [0], [0], [1], [0, 0, 1, 1], [], []>} : vector<8x72xbf16>, vector<72x384xbf16>, vector<8x384xf32> -> vector<8x384xf32>
    %c0_31 = arith.constant 0 : index
    %c0_32 = arith.constant 0 : index
    %31 = vector.load %arg3[%c0_31, %c0_32] : memref<8x1xf32, #tpu.memory_space<vmem>>, vector<8x1xf32>
    %32 = vector.broadcast %31 : vector<8x1xf32> to vector<8x384xf32>
    %33 = arith.addf %30, %32 : vector<8x384xf32>
    %cst_33 = arith.constant 0.000000e+00 : f32
    %34 = vector.broadcast %cst_33 : f32 to vector<8x384xf32>
    %35 = arith.maximumf %33, %34 : vector<8x384xf32>
    %c0_34 = arith.constant 0 : index
    %c0_35 = arith.constant 0 : index
    %36 = vector.load %arg6[%c0_34, %c0_35] : memref<1x384xf32, #tpu.memory_space<vmem>>, vector<1x384xf32>
    %37 = vector.broadcast %36 : vector<1x384xf32> to vector<8x384xf32>
    %38 = arith.mulf %35, %37 : vector<8x384xf32>
    %cst_36 = arith.constant 0.000000e+00 : f32
    %39 = vector.broadcast %cst_36 : f32 to vector<8x128xf32>
    %c0_37 = arith.constant 0 : index
    %c0_38 = arith.constant 0 : index
    %40 = vector.load %arg9[%c0_37, %c0_38] : memref<8x640xf32, #tpu.memory_space<vmem>>, vector<8x128xf32>
    tpu.vector_store %arg9[%c0_37, %c0_38], %39 {strides = array<i32>} : memref<8x640xf32, #tpu.memory_space<vmem>>, vector<8x128xf32>,
    %cst_39 = arith.constant 0.000000e+00 : f32
    %41 = vector.broadcast %cst_39 : f32 to vector<8x128xf32>
    %c0_40 = arith.constant 0 : index
    %c512 = arith.constant 512 : index
    %42 = vector.load %arg9[%c0_40, %c512] : memref<8x640xf32, #tpu.memory_space<vmem>>, vector<8x128xf32>
    tpu.vector_store %arg9[%c0_40, %c512], %41 {strides = array<i32>} : memref<8x640xf32, #tpu.memory_space<vmem>>, vector<8x128xf32>,
    %c0_41 = arith.constant 0 : index
    %c128_42 = arith.constant 128 : index
    %43 = vector.load %arg9[%c0_41, %c128_42] : memref<8x640xf32, #tpu.memory_space<vmem>>, vector<8x384xf32>
    tpu.vector_store %arg9[%c0_41, %c128_42], %38 {strides = array<i32>} : memref<8x640xf32, #tpu.memory_space<vmem>>, vector<8x384xf32>,
    %c0_43 = arith.constant 0 : index
    %c109_44 = arith.constant 109 : index
    %44 = vector.load %arg9[%c0_43, %c109_44] : memref<8x640xf32, #tpu.memory_space<vmem>>, vector<8x384xf32>
    %c0_45 = arith.constant 0 : index
    %c0_46 = arith.constant 0 : index
    %45 = vector.load %arg8[%c0_45, %c0_46] : memref<72x384xf32, #tpu.memory_space<vmem>>, vector<8x384xf32>
    tpu.vector_store %arg8[%c0_45, %c0_46], %44 {strides = array<i32>} : memref<72x384xf32, #tpu.memory_space<vmem>>, vector<8x384xf32>,
    %c0_47 = arith.constant 0 : index
    %c110_48 = arith.constant 110 : index
    %46 = vector.load %arg9[%c0_47, %c110_48] : memref<8x640xf32, #tpu.memory_space<vmem>>, vector<8x384xf32>
    %c8_49 = arith.constant 8 : index
    %c0_50 = arith.constant 0 : index
    %47 = vector.load %arg8[%c8_49, %c0_50] : memref<72x384xf32, #tpu.memory_space<vmem>>, vector<8x384xf32>
    tpu.vector_store %arg8[%c8_49, %c0_50], %46 {strides = array<i32>} : memref<72x384xf32, #tpu.memory_space<vmem>>, vector<8x384xf32>,
    %c0_51 = arith.constant 0 : index
    %c111_52 = arith.constant 111 : index
    %48 = vector.load %arg9[%c0_51, %c111_52] : memref<8x640xf32, #tpu.memory_space<vmem>>, vector<8x384xf32>
    %c16_53 = arith.constant 16 : index
    %c0_54 = arith.constant 0 : index
    %49 = vector.load %arg8[%c16_53, %c0_54] : memref<72x384xf32, #tpu.memory_space<vmem>>, vector<8x384xf32>
    tpu.vector_store %arg8[%c16_53, %c0_54], %48 {strides = array<i32>} : memref<72x384xf32, #tpu.memory_space<vmem>>, vector<8x384xf32>,
    %c0_55 = arith.constant 0 : index
    %c127_56 = arith.constant 127 : index
    %50 = vector.load %arg9[%c0_55, %c127_56] : memref<8x640xf32, #tpu.memory_space<vmem>>, vector<8x384xf32>
    %c24_57 = arith.constant 24 : index
    %c0_58 = arith.constant 0 : index
    %51 = vector.load %arg8[%c24_57, %c0_58] : memref<72x384xf32, #tpu.memory_space<vmem>>, vector<8x384xf32>
    tpu.vector_store %arg8[%c24_57, %c0_58], %50 {strides = array<i32>} : memref<72x384xf32, #tpu.memory_space<vmem>>, vector<8x384xf32>,
    %c0_59 = arith.constant 0 : index
    %c128_60 = arith.constant 128 : index
    %52 = vector.load %arg9[%c0_59, %c128_60] : memref<8x640xf32, #tpu.memory_space<vmem>>, vector<8x384xf32>
    %c32_61 = arith.constant 32 : index
    %c0_62 = arith.constant 0 : index
    %53 = vector.load %arg8[%c32_61, %c0_62] : memref<72x384xf32, #tpu.memory_space<vmem>>, vector<8x384xf32>
    tpu.vector_store %arg8[%c32_61, %c0_62], %52 {strides = array<i32>} : memref<72x384xf32, #tpu.memory_space<vmem>>, vector<8x384xf32>,
    %c0_63 = arith.constant 0 : index
    %c129_64 = arith.constant 129 : index
    %54 = vector.load %arg9[%c0_63, %c129_64] : memref<8x640xf32, #tpu.memory_space<vmem>>, vector<8x384xf32>
    %c40_65 = arith.constant 40 : index
    %c0_66 = arith.constant 0 : index
    %55 = vector.load %arg8[%c40_65, %c0_66] : memref<72x384xf32, #tpu.memory_space<vmem>>, vector<8x384xf32>
    tpu.vector_store %arg8[%c40_65, %c0_66], %54 {strides = array<i32>} : memref<72x384xf32, #tpu.memory_space<vmem>>, vector<8x384xf32>,
    %c0_67 = arith.constant 0 : index
    %c145_68 = arith.constant 145 : index
    %56 = vector.load %arg9[%c0_67, %c145_68] : memref<8x640xf32, #tpu.memory_space<vmem>>, vector<8x384xf32>
    %c48_69 = arith.constant 48 : index
    %c0_70 = arith.constant 0 : index
    %57 = vector.load %arg8[%c48_69, %c0_70] : memref<72x384xf32, #tpu.memory_space<vmem>>, vector<8x384xf32>
    tpu.vector_store %arg8[%c48_69, %c0_70], %56 {strides = array<i32>} : memref<72x384xf32, #tpu.memory_space<vmem>>, vector<8x384xf32>,
    %c0_71 = arith.constant 0 : index
    %c146_72 = arith.constant 146 : index
    %58 = vector.load %arg9[%c0_71, %c146_72] : memref<8x640xf32, #tpu.memory_space<vmem>>, vector<8x384xf32>
    %c56_73 = arith.constant 56 : index
    %c0_74 = arith.constant 0 : index
    %59 = vector.load %arg8[%c56_73, %c0_74] : memref<72x384xf32, #tpu.memory_space<vmem>>, vector<8x384xf32>
    tpu.vector_store %arg8[%c56_73, %c0_74], %58 {strides = array<i32>} : memref<72x384xf32, #tpu.memory_space<vmem>>, vector<8x384xf32>,
    %c0_75 = arith.constant 0 : index
    %c147_76 = arith.constant 147 : index
    %60 = vector.load %arg9[%c0_75, %c147_76] : memref<8x640xf32, #tpu.memory_space<vmem>>, vector<8x384xf32>
    %c64_77 = arith.constant 64 : index
    %c0_78 = arith.constant 0 : index
    %61 = vector.load %arg8[%c64_77, %c0_78] : memref<72x384xf32, #tpu.memory_space<vmem>>, vector<8x384xf32>
    tpu.vector_store %arg8[%c64_77, %c0_78], %60 {strides = array<i32>} : memref<72x384xf32, #tpu.memory_space<vmem>>, vector<8x384xf32>,
    %c0_79 = arith.constant 0 : index
    %c0_80 = arith.constant 0 : index
    %c128_81 = arith.constant 128 : index
    %62 = vector.load %arg1[%c0_79, %c0_80, %c128_81] : memref<1x8x640xf32, #tpu.memory_space<vmem>>, vector<1x8x384xf32>
    %63 = vector.shape_cast %62 : vector<1x8x384xf32> to vector<8x384xf32>
    %c0_82 = arith.constant 0 : index
    %c0_83 = arith.constant 0 : index
    %64 = vector.load %arg8[%c0_82, %c0_83] : memref<72x384xf32, #tpu.memory_space<vmem>>, vector<72x384xf32>
    %65 = arith.truncf %64 : vector<72x384xf32> to vector<72x384xbf16>
    %c0_84 = arith.constant 0 : index
    %c0_85 = arith.constant 0 : index
    %66 = vector.load %arg4[%c0_84, %c0_85] : memref<8x72xbf16, #tpu.memory_space<vmem>>, vector<8x72xbf16>
    %cst_86 = arith.constant dense<0.000000e+00> : vector<8x384xf32>
    %67 = tpu.matmul %66, %65, %cst_86 {dimension_numbers = #tpu.dot_dimension_numbers<[1], [0], [0], [1], [0, 0, 1, 1], [], []>} : vector<8x72xbf16>, vector<72x384xbf16>, vector<8x384xf32> -> vector<8x384xf32>
    %c0_87 = arith.constant 0 : index
    %c0_88 = arith.constant 0 : index
    %68 = vector.load %arg5[%c0_87, %c0_88] : memref<8x1xf32, #tpu.memory_space<vmem>>, vector<8x1xf32>
    %69 = vector.broadcast %68 : vector<8x1xf32> to vector<8x384xf32>
    %70 = arith.addf %67, %69 : vector<8x384xf32>
    %71 = arith.addf %63, %70 : vector<8x384xf32>
    %cst_89 = arith.constant 0.000000e+00 : f32
    %72 = vector.broadcast %cst_89 : f32 to vector<8x384xf32>
    %73 = arith.maximumf %71, %72 : vector<8x384xf32>
    %c0_90 = arith.constant 0 : index
    %c0_91 = arith.constant 0 : index
    %c0_92 = arith.constant 0 : index
    %74 = vector.load %arg7[%c0_90, %c0_91, %c0_92] : memref<1x8x384xf32, #tpu.memory_space<vmem>>, vector<1x8x384xf32>
    %75 = vector.shape_cast %74 : vector<1x8x384xf32> to vector<8x384xf32>
    %76 = vector.shape_cast %73 : vector<8x384xf32> to vector<1x8x384xf32>
    tpu.vector_store %arg7[%c0_90, %c0_91, %c0_92], %76 {strides = array<i32>} : memref<1x8x384xf32, #tpu.memory_space<vmem>>, vector<1x8x384xf32>,
    return
  }
  func.func @transform_0(%arg0: i32) -> (i32, i32, i32) {
    %c0_i32 = arith.constant 0 : i32
    %c0_i32_0 = arith.constant 0 : i32
    %c0_i32_1 = arith.constant 0 : i32
    return %arg0, %c0_i32, %c0_i32_0 : i32, i32, i32
  }
  func.func @transform_1(%arg0: i32) -> (i32, i32) {
    %c0_i32 = arith.constant 0 : i32
    %c0_i32_0 = arith.constant 0 : i32
    %c0_i32_1 = arith.constant 0 : i32
    return %c0_i32, %c0_i32_0 : i32, i32
  }
  func.func @transform_2(%arg0: i32) -> (i32, i32) {
    %c0_i32 = arith.constant 0 : i32
    %c0_i32_0 = arith.constant 0 : i32
    %c0_i32_1 = arith.constant 0 : i32
    return %c0_i32, %c0_i32_0 : i32, i32
  }
  func.func @transform_3(%arg0: i32) -> (i32, i32) {
    %c0_i32 = arith.constant 0 : i32
    %c0_i32_0 = arith.constant 0 : i32
    %c0_i32_1 = arith.constant 0 : i32
    return %c0_i32, %c0_i32_0 : i32, i32
  }
  func.func @transform_4(%arg0: i32) -> (i32, i32) {
    %c0_i32 = arith.constant 0 : i32
    %c0_i32_0 = arith.constant 0 : i32
    %c0_i32_1 = arith.constant 0 : i32
    return %c0_i32, %c0_i32_0 : i32, i32
  }
  func.func @transform_5(%arg0: i32) -> (i32, i32) {
    %c0_i32 = arith.constant 0 : i32
    %c0_i32_0 = arith.constant 0 : i32
    %c0_i32_1 = arith.constant 0 : i32
    return %c0_i32, %c0_i32_0 : i32, i32
  }
  func.func @transform_6(%arg0: i32) -> (i32, i32, i32) {
    %c0_i32 = arith.constant 0 : i32
    %c0_i32_0 = arith.constant 0 : i32
    %c0_i32_1 = arith.constant 0 : i32
    return %arg0, %c0_i32, %c0_i32_0 : i32, i32, i32
  }
}

</mosaic_0001>

<llo_original>
// kernel: tpu_custom_call.1
$region0: #{tpu_custom_call.1}
  #allocation0 [shape = 'u32[]', space=smem, size = 0x4, offset = 0x4, fixed_abs, tag = 'smem constant byte address 0x4 - core index']
  #allocation1 [shape = 'u32[72,128]{1,0:T(1,128)}', space=vmem, size = 0x9000, scoped, tag = 'internal scratch']
  #allocation2 [shape = 'f32[72,384]{1,0:T(8,128)}', space=vmem, size = 0x1b000, scoped, tag = 'scratch operand']
  #allocation3 [shape = 'f32[8,640]{1,0:T(8,128)}', space=vmem, size = 0x5000, scoped, tag = 'scratch operand']
  %s0 = inlined_call_operand.hbm [shape: f32[2,8,640], index: 0, kind: input, shape index: {}]
  %s1 = inlined_call_operand.vmem [shape: bf16[8,72], index: 1, kind: input, shape index: {}]
  %s2 = inlined_call_operand.vmem [shape: f32[8,1], index: 2, kind: input, shape index: {}]
  %s3 = inlined_call_operand.vmem [shape: bf16[8,72], index: 3, kind: input, shape index: {}]
  %s4 = inlined_call_operand.vmem [shape: f32[8,1], index: 4, kind: input, shape index: {}]
  %s5 = inlined_call_operand.vmem [shape: f32[1,384], index: 5, kind: input, shape index: {}]
  %s6 = inlined_call_operand.hbm [shape: f32[2,8,384], index: 6, kind: output, shape index: {}]
  %s7 = sld [smem:[#allocation0]]
  $region61: #{tpu_custom_call.1} parent=0
    _
  %s9 = ssub.s32 1, %s7
  %s10 = scalar_select 0, %s9, %s7
  $region1: #{tpu_custom_call.1} parent=0
    #allocation4 [shape = 'u8[40960]{0}', space=vmem, size = 0xa000, scoped, tag = 'input window, operand 0']
    #allocation5 [shape = 's32[2]{0}', space=sflag, size = 0x8, scoped, tag = 'scoped memory for tpu_custom_call.1']
    #allocation6 [shape = 's32[2]{0}', space=sflag, size = 0x8, scoped, tag = 'scoped memory for tpu_custom_call.1']
    #allocation7 [shape = 'u8[24576]{0}', space=vmem, size = 0x6000, scoped, tag = 'output window, operand 0']
    %11 = vsyncpa [#allocation5], 0
    %s12 = scalar_lea.sflag [#allocation5], 1
    %13 = vsyncpa %s12, 0
    %14 = vsyncpa [#allocation6], 0
    %s15 = scalar_lea.sflag [#allocation6], 1
    %16 = vsyncpa %s15, 0
    loop: start=0, step=1, limit=4
    $region2: #{tpu_custom_call.1} parent=1 // loop_pre_header
      _
    $region3: #{tpu_custom_call.1} parent=1 // loop_header
      %s18 = sphi 0, %s22
      %p19 = scmp.ge.s32.totalorder %s18, 4
      %s28 = sphi 0, %s30
      %s31 = sphi 0, %s28
      %s32 = sphi 0, %s31
      %s48 = sphi 0, %s32
      %s52 = sphi 0, %s52
      %s54 = sphi 0, %s52
      %s55 = sphi 0, %s54
      %s69 = sphi 0, %s55
      %s73 = sphi 0, %s73
      %s75 = sphi 0, %s73
      %s76 = sphi 0, %s75
      %s90 = sphi 0, %s76
      %s94 = sphi 0, %s94
      %s96 = sphi 0, %s94
      %s97 = sphi 0, %s96
      %s111 = sphi 0, %s97
      %s115 = sphi 0, %s115
      %s117 = sphi 0, %s115
      %s118 = sphi 0, %s117
      %s132 = sphi 0, %s118
      %s136 = sphi 0, %s136
      %s138 = sphi 0, %s136
      %s139 = sphi 0, %s138
      %s153 = sphi 0, %s139
      %s159 = sphi 0, %s161
      %s162 = sphi 0, %s159
      %s163 = sphi 0, %s162
      %s179 = sphi 0, %s163
    $region4: #{tpu_custom_call.1} parent=1 // loop_header_branch
      %21 = sbr.rel (%p19) target = $region8
    $region5: #{tpu_custom_call.1} parent=1 // loop_body
      %s23 = ssub.s32 %s18, 1
      %s24 = ssub.s32 %s18, 2
      %s25 = sadd.s32 %s18, 1
      %s26 = ssub.s32 %s18, %s25
      %p27 = scmp.eq.s32.totalorder %s26, 0
      %s29 = sadd.s32 %s28, 1
      %s30 = scalar_select %p27, %s28, %s29
      %p33 = pneg %p27
      %p34 = scmp.eq.s32.totalorder %s18, 1
      %p35 = por %p33, %p34
      %p36 = scmp.ne.s32.totalorder %s28, %s31
      %p37 = scmp.eq.s32.totalorder %s18, 0
      %p38 = por %p36, %p37
      %p39 = scmp.ne.s32.totalorder %s28, %s31
      %p40 = scmp.eq.s32.totalorder %s23, 1
      %p41 = por %p39, %p40
      %p42 = scmp.ne.s32.totalorder %s31, %s32
      %p43 = scmp.eq.s32.totalorder %s23, 0
      %p44 = por %p42, %p43
      %p45 = scmp.ne.s32.totalorder %s31, %s32
      %p46 = scmp.eq.s32.totalorder %s24, 1
      %p47 = por %p45, %p46
      %p49 = scmp.ne.s32.totalorder %s32, %s48
      %p50 = scmp.eq.s32.totalorder %s24, 0
      %p51 = por %p49, %p50
      %s53 = sadd.s32 %s52, 1
      %p56 = scmp.eq.s32.totalorder %s18, 1
      %p57 = scmp.ne.s32.totalorder %s52, %s54
      %p58 = scmp.eq.s32.totalorder %s18, 0
      %p59 = por %p57, %p58
      %p60 = scmp.ne.s32.totalorder %s52, %s54
      %p61 = scmp.eq.s32.totalorder %s23, 1
      %p62 = por %p60, %p61
      %p63 = scmp.ne.s32.totalorder %s54, %s55
      %p64 = scmp.eq.s32.totalorder %s23, 0
      %p65 = por %p63, %p64
      %p66 = scmp.ne.s32.totalorder %s54, %s55
      %p67 = scmp.eq.s32.totalorder %s24, 1
      %p68 = por %p66, %p67
      %p70 = scmp.ne.s32.totalorder %s55, %s69
      %p71 = scmp.eq.s32.totalorder %s24, 0
      %p72 = por %p70, %p71
      %s74 = sadd.s32 %s73, 1
      %p77 = scmp.eq.s32.totalorder %s18, 1
      %p78 = scmp.ne.s32.totalorder %s73, %s75
      %p79 = scmp.eq.s32.totalorder %s18, 0
      %p80 = por %p78, %p79
      %p81 = scmp.ne.s32.totalorder %s73, %s75
      %p82 = scmp.eq.s32.totalorder %s23, 1
      %p83 = por %p81, %p82
      %p84 = scmp.ne.s32.totalorder %s75, %s76
      %p85 = scmp.eq.s32.totalorder %s23, 0
      %p86 = por %p84, %p85
      %p87 = scmp.ne.s32.totalorder %s75, %s76
      %p88 = scmp.eq.s32.totalorder %s24, 1
      %p89 = por %p87, %p88
      %p91 = scmp.ne.s32.totalorder %s76, %s90
      %p92 = scmp.eq.s32.totalorder %s24, 0
      %p93 = por %p91, %p92
      %s95 = sadd.s32 %s94, 1
      %p98 = scmp.eq.s32.totalorder %s18, 1
      %p99 = scmp.ne.s32.totalorder %s94, %s96
      %p100 = scmp.eq.s32.totalorder %s18, 0
      %p101 = por %p99, %p100
      %p102 = scmp.ne.s32.totalorder %s94, %s96
      %p103 = scmp.eq.s32.totalorder %s23, 1
      %p104 = por %p102, %p103
      %p105 = scmp.ne.s32.totalorder %s96, %s97
      %p106 = scmp.eq.s32.totalorder %s23, 0
      %p107 = por %p105, %p106
      %p108 = scmp.ne.s32.totalorder %s96, %s97
      %p109 = scmp.eq.s32.totalorder %s24, 1
      %p110 = por %p108, %p109
      %p112 = scmp.ne.s32.totalorder %s97, %s111
      %p113 = scmp.eq.s32.totalorder %s24, 0
      %p114 = por %p112, %p113
      %s116 = sadd.s32 %s115, 1
      %p119 = scmp.eq.s32.totalorder %s18, 1
      %p120 = scmp.ne.s32.totalorder %s115, %s117
      %p121 = scmp.eq.s32.totalorder %s18, 0
      %p122 = por %p120, %p121
      %p123 = scmp.ne.s32.totalorder %s115, %s117
      %p124 = scmp.eq.s32.totalorder %s23, 1
      %p125 = por %p123, %p124
      %p126 = scmp.ne.s32.totalorder %s117, %s118
      %p127 = scmp.eq.s32.totalorder %s23, 0
      %p128 = por %p126, %p127
      %p129 = scmp.ne.s32.totalorder %s117, %s118
      %p130 = scmp.eq.s32.totalorder %s24, 1
      %p131 = por %p129, %p130
      %p133 = scmp.ne.s32.totalorder %s118, %s132
      %p134 = scmp.eq.s32.totalorder %s24, 0
      %p135 = por %p133, %p134
      %s137 = sadd.s32 %s136, 1
      %p140 = scmp.eq.s32.totalorder %s18, 1
      %p141 = scmp.ne.s32.totalorder %s136, %s138
      %p142 = scmp.eq.s32.totalorder %s18, 0
      %p143 = por %p141, %p142
      %p144 = scmp.ne.s32.totalorder %s136, %s138
      %p145 = scmp.eq.s32.totalorder %s23, 1
      %p146 = por %p144, %p145
      %p147 = scmp.ne.s32.totalorder %s138, %s139
      %p148 = scmp.eq.s32.totalorder %s23, 0
      %p149 = por %p147, %p148
      %p150 = scmp.ne.s32.totalorder %s138, %s139
      %p151 = scmp.eq.s32.totalorder %s24, 1
      %p152 = por %p150, %p151
      %p154 = scmp.ne.s32.totalorder %s139, %s153
      %p155 = scmp.eq.s32.totalorder %s24, 0
      %p156 = por %p154, %p155
      %s157 = ssub.s32 %s18, %s25
      %p158 = scmp.eq.s32.totalorder %s157, 0
      %s160 = sadd.s32 %s159, 1
      %s161 = scalar_select %p158, %s159, %s160
      %p164 = pneg %p158
      %p165 = scmp.eq.s32.totalorder %s18, 1
      %p166 = por %p164, %p165
      %p167 = scmp.ne.s32.totalorder %s159, %s162
      %p168 = scmp.eq.s32.totalorder %s18, 0
      %p169 = por %p167, %p168
      %p170 = scmp.ne.s32.totalorder %s159, %s162
      %p171 = scmp.eq.s32.totalorder %s23, 1
      %p172 = por %p170, %p171
      %p173 = scmp.ne.s32.totalorder %s162, %s163
      %p174 = scmp.eq.s32.totalorder %s23, 0
      %p175 = por %p173, %p174
      %p176 = scmp.ne.s32.totalorder %s162, %s163
      %p177 = scmp.eq.s32.totalorder %s24, 1
      %p178 = por %p176, %p177
      %p180 = scmp.ne.s32.totalorder %s163, %s179
      %p181 = scmp.eq.s32.totalorder %s24, 0
      %p182 = por %p180, %p181
      %p183 = scmp.le.s32.totalorder 1, %s18
      %p184 = scmp.lt.s32.totalorder %s18, 3
      %p185 = pnand %p183, %p184
      %p186 = pneg %p185
      // Predicated region
      $region9: #{tpu_custom_call.1} parent=5 // pred_check
        _
      $region10: #{tpu_custom_call.1} parent=5 // pred_check_branch
        %188 = sbr.rel (%p185) target = $region12
      $region11: #{tpu_custom_call.1} parent=5 // pred_region
        %s189 = ssub.s32 %s18, 1
        // Predicated region
        $region13: #{tpu_custom_call.1} parent=11 // pred_check
          %p190 = pneg %p65
        $region14: #{tpu_custom_call.1} parent=11 // pred_check_branch
          %192 = sbr.rel (%p190) target = $region16
        $region15: #{tpu_custom_call.1} parent=11 // pred_region
          _
        $region16: #{tpu_custom_call.1} parent=11 // pred_fallthru
          _
        // Predicated region
        $region17: #{tpu_custom_call.1} parent=11 // pred_check
          %p193 = pneg %p86
        $region18: #{tpu_custom_call.1} parent=11 // pred_check_branch
          %195 = sbr.rel (%p193) target = $region20
        $region19: #{tpu_custom_call.1} parent=11 // pred_region
          _
        $region20: #{tpu_custom_call.1} parent=11 // pred_fallthru
          _
        // Predicated region
        $region21: #{tpu_custom_call.1} parent=11 // pred_check
          %p196 = pneg %p107
        $region22: #{tpu_custom_call.1} parent=11 // pred_check_branch
          %198 = sbr.rel (%p196) target = $region24
        $region23: #{tpu_custom_call.1} parent=11 // pred_region
          _
        $region24: #{tpu_custom_call.1} parent=11 // pred_fallthru
          _
        // Predicated region
        $region25: #{tpu_custom_call.1} parent=11 // pred_check
          %p199 = pneg %p128
        $region26: #{tpu_custom_call.1} parent=11 // pred_check_branch
          %201 = sbr.rel (%p199) target = $region28
        $region27: #{tpu_custom_call.1} parent=11 // pred_region
          _
        $region28: #{tpu_custom_call.1} parent=11 // pred_fallthru
          _
        // Predicated region
        $region29: #{tpu_custom_call.1} parent=11 // pred_check
          %p202 = pneg %p149
        $region30: #{tpu_custom_call.1} parent=11 // pred_check_branch
          %204 = sbr.rel (%p202) target = $region32
        $region31: #{tpu_custom_call.1} parent=11 // pred_region
          _
        $region32: #{tpu_custom_call.1} parent=11 // pred_fallthru
          _
      $region12: #{tpu_custom_call.1} parent=5 // pred_fallthru
        _
      %p205 = scmp.lt.s32.totalorder %s18, 2
      // Predicated region
      $region33: #{tpu_custom_call.1} parent=5 // pred_check
        %p206 = pneg %p205
      $region34: #{tpu_custom_call.1} parent=5 // pred_check_branch
        %208 = sbr.rel (%p206) target = $region36
      $region35: #{tpu_custom_call.1} parent=5 // pred_region
        // Predicated region
        $region37: #{tpu_custom_call.1} parent=35 // pred_check
          %p209 = pneg %p38
        $region38: #{tpu_custom_call.1} parent=35 // pred_check_branch
          %211 = sbr.rel (%p209) target = $region40
        $region39: #{tpu_custom_call.1} parent=35 // pred_region
          %s212 = sand.u32 %s28, 1
          %s213 = scalar_lea.sflag [#allocation5], %s212
          %s214 = sand.u32 %s28, 1
          %s215 = smul.addr %s214, 40
          %s216 = scalar_lea.vmem [#allocation4], %s215
          %218 = vsyncadd %s213, 0
          %s219 = smul.addr %s18, 5
          %s220 = smul.addr %s219, 8
          %s221 = scalar_lea.hbm %s0, %s220
          %s223 = sshll.u32 %s221, 4
          %s224 = int_to_ptr.hbm [resolvable:$true] %s223
          %s225 = sshll.u32 %s216, 4
          %s226 = int_to_ptr.vmem [resolvable:$true] %s225
          %228 = dma.hbm_to_vmem [thread:$0]  %s224, 640, %s226, %s213
        $region40: #{tpu_custom_call.1} parent=35 // pred_fallthru
          _
      $region36: #{tpu_custom_call.1} parent=5 // pred_fallthru
        _
      %p229 = scmp.le.s32.totalorder 1, %s18
      %p230 = scmp.lt.s32.totalorder %s18, 3
      %p231 = pnand %p229, %p230
      %p232 = pneg %p231
      // Predicated region
      $region41: #{tpu_custom_call.1} parent=5 // pred_check
        _
      $region42: #{tpu_custom_call.1} parent=5 // pred_check_branch
        %234 = sbr.rel (%p231) target = $region44
      $region43: #{tpu_custom_call.1} parent=5 // pred_region
        %s235 = ssub.s32 %s18, 1
        %s236 = sand.u32 %s31, 1
        %s237 = scalar_lea.sflag [#allocation5], %s236
        %s238 = sand.u32 %s31, 1
        %s239 = smul.addr %s238, 40
        %s240 = scalar_lea.vmem [#allocation4], %s239
        // Predicated region
        $region45: #{tpu_custom_call.1} parent=43 // pred_check
          %p241 = pneg %p44
        $region46: #{tpu_custom_call.1} parent=43 // pred_check_branch
          %243 = sbr.rel (%p241) target = $region48
        $region47: #{tpu_custom_call.1} parent=43 // pred_region
          %245 = dma.done %s237, 640
        $region48: #{tpu_custom_call.1} parent=43 // pred_fallthru
          _
        %s246 = sand.u32 %s31, 1
        %s247 = scalar_lea.sflag [#allocation5], %s246
        %s248 = sand.u32 %s31, 1
        %s249 = smul.addr %s248, 40
        %s250 = scalar_lea.vmem [#allocation4], %s249
        %p251 = pneg %p44
        %p252 = pneg %p41
        %p253 = pneg %p65
        %p254 = pneg %p62
        %p255 = pneg %p86
        %p256 = pneg %p83
        %p257 = pneg %p107
        %p258 = pneg %p104
        %p259 = pneg %p128
        %p260 = pneg %p125
        %p261 = pneg %p149
        %p262 = pneg %p146
        %p263 = pneg %p175
        %p264 = pneg %p172
        %s265 = sand.u32 %s162, 1
        %s266 = scalar_lea.sflag [#allocation6], %s265
        %s267 = sand.u32 %s162, 1
        %s268 = smul.addr %s267, 24
        %s269 = scalar_lea.vmem [#allocation7], %s268
        %v271 = vld [vmem:[%s240] sm:$0xff]
        %v272 = vld [vmem:[%s240 + $0x8] sm:$0xff]
        %v273 = vld [vmem:[%s240 + $0x10] sm:$0xff]
        %v274 = vld [vmem:[%s240 + $0x18] sm:$0xff]
        %279 = vrot.lane.b32.xlu0 %v271, 19
        %v280 = vpop.permute.xlu0 %279
        %281 = vrot.lane.b32.xlu0 %v272, 19
        %v282 = vpop.permute.xlu0 %281
        %283 = vrot.lane.b32.xlu0 %v273, 19
        %v284 = vpop.permute.xlu0 %283
        %285 = vrot.lane.b32.xlu0 %v274, 19
        %v286 = vpop.permute.xlu0 %285
        %vm287 = vcmask 154624
        %v288 = vsel %vm287, %v280, %v282
        %v289 = vsel %vm287, %v282, %v284
        %v290 = vsel %vm287, %v284, %v286
        %294 = vst [vmem:[#allocation2] sm:$0xff] %v288
        %295 = vst [vmem:[#allocation2 + $0x8] sm:$0xff] %v289
        %296 = vst [vmem:[#allocation2 + $0x10] sm:$0xff] %v290
        %v297 = vld [vmem:[%s240] sm:$0xff]
        %v298 = vld [vmem:[%s240 + $0x8] sm:$0xff]
        %v299 = vld [vmem:[%s240 + $0x10] sm:$0xff]
        %v300 = vld [vmem:[%s240 + $0x18] sm:$0xff]
        %305 = vrot.lane.b32.xlu0 %v297, 18
        %v306 = vpop.permute.xlu0 %305
        %307 = vrot.lane.b32.xlu0 %v298, 18
        %v308 = vpop.permute.xlu0 %307
        %309 = vrot.lane.b32.xlu0 %v299, 18
        %v310 = vpop.permute.xlu0 %309
        %311 = vrot.lane.b32.xlu0 %v300, 18
        %v312 = vpop.permute.xlu0 %311
        %vm313 = vcmask 146432
        %v314 = vsel %vm313, %v306, %v308
        %v315 = vsel %vm313, %v308, %v310
        %v316 = vsel %vm313, %v310, %v312
        %320 = vst [vmem:[#allocation2 + $0x18] sm:$0xff] %v314
        %321 = vst [vmem:[#allocation2 + $0x20] sm:$0xff] %v315
        %322 = vst [vmem:[#allocation2 + $0x28] sm:$0xff] %v316
        %v323 = vld [vmem:[%s240] sm:$0xff]
        %v324 = vld [vmem:[%s240 + $0x8] sm:$0xff]
        %v325 = vld [vmem:[%s240 + $0x10] sm:$0xff]
        %v326 = vld [vmem:[%s240 + $0x18] sm:$0xff]
        %331 = vrot.lane.b32.xlu0 %v323, 17
        %v332 = vpop.permute.xlu0 %331
        %333 = vrot.lane.b32.xlu0 %v324, 17
        %v334 = vpop.permute.xlu0 %333
        %335 = vrot.lane.b32.xlu0 %v325, 17
        %v336 = vpop.permute.xlu0 %335
        %337 = vrot.lane.b32.xlu0 %v326, 17
        %v338 = vpop.permute.xlu0 %337
        %vm339 = vcmask 138240
        %v340 = vsel %vm339, %v332, %v334
        %v341 = vsel %vm339, %v334, %v336
        %v342 = vsel %vm339, %v336, %v338
        %346 = vst [vmem:[#allocation2 + $0x30] sm:$0xff] %v340
        %347 = vst [vmem:[#allocation2 + $0x38] sm:$0xff] %v341
        %348 = vst [vmem:[#allocation2 + $0x40] sm:$0xff] %v342
        %v349 = vld [vmem:[%s240] sm:$0xff]
        %v350 = vld [vmem:[%s240 + $0x8] sm:$0xff]
        %v351 = vld [vmem:[%s240 + $0x10] sm:$0xff]
        %v352 = vld [vmem:[%s240 + $0x18] sm:$0xff]
        %357 = vrot.lane.b32.xlu0 %v349, 1
        %v358 = vpop.permute.xlu0 %357
        %359 = vrot.lane.b32.xlu0 %v350, 1
        %v360 = vpop.permute.xlu0 %359
        %361 = vrot.lane.b32.xlu0 %v351, 1
        %v362 = vpop.permute.xlu0 %361
        %363 = vrot.lane.b32.xlu0 %v352, 1
        %v364 = vpop.permute.xlu0 %363
        %vm365 = vcmask 7168
        %v366 = vsel %vm365, %v358, %v360
        %v367 = vsel %vm365, %v360, %v362
        %v368 = vsel %vm365, %v362, %v364
        %372 = vst [vmem:[#allocation2 + $0x48] sm:$0xff] %v366
        %373 = vst [vmem:[#allocation2 + $0x50] sm:$0xff] %v367
        %374 = vst [vmem:[#allocation2 + $0x58] sm:$0xff] %v368
        %v375 = vld [vmem:[%s240 + $0x8] sm:$0xff]
        %v376 = vld [vmem:[%s240 + $0x10] sm:$0xff]
        %v377 = vld [vmem:[%s240 + $0x18] sm:$0xff]
        %378 = vst [vmem:[#allocation2 + $0x60] sm:$0xff] %v375
        %379 = vst [vmem:[#allocation2 + $0x68] sm:$0xff] %v376
        %380 = vst [vmem:[#allocation2 + $0x70] sm:$0xff] %v377
        %v381 = vld [vmem:[%s240 + $0x8] sm:$0xff]
        %v382 = vld [vmem:[%s240 + $0x10] sm:$0xff]
        %v383 = vld [vmem:[%s240 + $0x18] sm:$0xff]
        %v384 = vld [vmem:[%s240 + $0x20] sm:$0xff]
        %389 = vrot.lane.b32.xlu0 %v381, 127
        %v390 = vpop.permute.xlu0 %389
        %391 = vrot.lane.b32.xlu0 %v382, 127
        %v392 = vpop.permute.xlu0 %391
        %393 = vrot.lane.b32.xlu0 %v383, 127
        %v394 = vpop.permute.xlu0 %393
        %395 = vrot.lane.b32.xlu0 %v384, 127
        %v396 = vpop.permute.xlu0 %395
        %vm397 = vcmask 1039360
        %v398 = vsel %vm397, %v390, %v392
        %v399 = vsel %vm397, %v392, %v394
        %v400 = vsel %vm397, %v394, %v396
        %404 = vst [vmem:[#allocation2 + $0x78] sm:$0xff] %v398
        %405 = vst [vmem:[#allocation2 + $0x80] sm:$0xff] %v399
        %406 = vst [vmem:[#allocation2 + $0x88] sm:$0xff] %v400
        %v407 = vld [vmem:[%s240 + $0x8] sm:$0xff]
        %v408 = vld [vmem:[%s240 + $0x10] sm:$0xff]
        %v409 = vld [vmem:[%s240 + $0x18] sm:$0xff]
        %v410 = vld [vmem:[%s240 + $0x20] sm:$0xff]
        %415 = vrot.lane.b32.xlu0 %v407, 111
        %v416 = vpop.permute.xlu0 %415
        %417 = vrot.lane.b32.xlu0 %v408, 111
        %v418 = vpop.permute.xlu0 %417
        %419 = vrot.lane.b32.xlu0 %v409, 111
        %v420 = vpop.permute.xlu0 %419
        %421 = vrot.lane.b32.xlu0 %v410, 111
        %v422 = vpop.permute.xlu0 %421
        %vm423 = vcmask 908288
        %v424 = vsel %vm423, %v416, %v418
        %v425 = vsel %vm423, %v418, %v420
        %v426 = vsel %vm423, %v420, %v422
        %430 = vst [vmem:[#allocation2 + $0x90] sm:$0xff] %v424
        %431 = vst [vmem:[#allocation2 + $0x98] sm:$0xff] %v425
        %432 = vst [vmem:[#allocation2 + $0xa0] sm:$0xff] %v426
        %v433 = vld [vmem:[%s240 + $0x8] sm:$0xff]
        %v434 = vld [vmem:[%s240 + $0x10] sm:$0xff]
        %v435 = vld [vmem:[%s240 + $0x18] sm:$0xff]
        %v436 = vld [vmem:[%s240 + $0x20] sm:$0xff]
        %441 = vrot.lane.b32.xlu0 %v433, 110
        %v442 = vpop.permute.xlu0 %441
        %443 = vrot.lane.b32.xlu0 %v434, 110
        %v444 = vpop.permute.xlu0 %443
        %445 = vrot.lane.b32.xlu0 %v435, 110
        %v446 = vpop.permute.xlu0 %445
        %447 = vrot.lane.b32.xlu0 %v436, 110
        %v448 = vpop.permute.xlu0 %447
        %vm449 = vcmask 900096
        %v450 = vsel %vm449, %v442, %v444
        %v451 = vsel %vm449, %v444, %v446
        %v452 = vsel %vm449, %v446, %v448
        %456 = vst [vmem:[#allocation2 + $0xa8] sm:$0xff] %v450
        %457 = vst [vmem:[#allocation2 + $0xb0] sm:$0xff] %v451
        %458 = vst [vmem:[#allocation2 + $0xb8] sm:$0xff] %v452
        %v459 = vld [vmem:[%s240 + $0x8] sm:$0xff]
        %v460 = vld [vmem:[%s240 + $0x10] sm:$0xff]
        %v461 = vld [vmem:[%s240 + $0x18] sm:$0xff]
        %v462 = vld [vmem:[%s240 + $0x20] sm:$0xff]
        %467 = vrot.lane.b32.xlu0 %v459, 109
        %v468 = vpop.permute.xlu0 %467
        %469 = vrot.lane.b32.xlu0 %v460, 109
        %v470 = vpop.permute.xlu0 %469
        %471 = vrot.lane.b32.xlu0 %v461, 109
        %v472 = vpop.permute.xlu0 %471
        %473 = vrot.lane.b32.xlu0 %v462, 109
        %v474 = vpop.permute.xlu0 %473
        %vm475 = vcmask 891904
        %v476 = vsel %vm475, %v468, %v470
        %v477 = vsel %vm475, %v470, %v472
        %v478 = vsel %vm475, %v472, %v474
        %482 = vst [vmem:[#allocation2 + $0xc0] sm:$0xff] %v476
        %483 = vst [vmem:[#allocation2 + $0xc8] sm:$0xff] %v477
        %484 = vst [vmem:[#allocation2 + $0xd0] sm:$0xff] %v478
        %v485 = vld [vmem:[#allocation2] sm:$0xff]
        %v486 = vld [vmem:[#allocation2 + $0x8] sm:$0xff]
        %v487 = vld [vmem:[#allocation2 + $0x10] sm:$0xff]
        %v488 = vld [vmem:[#allocation2 + $0x18] sm:$0xff]
        %v489 = vld [vmem:[#allocation2 + $0x20] sm:$0xff]
        %v490 = vld [vmem:[#allocation2 + $0x28] sm:$0xff]
        %v491 = vld [vmem:[#allocation2 + $0x30] sm:$0xff]
        %v492 = vld [vmem:[#allocation2 + $0x38] sm:$0xff]
        %v493 = vld [vmem:[#allocation2 + $0x40] sm:$0xff]
        %v494 = vld [vmem:[#allocation2 + $0x48] sm:$0xff]
        %v495 = vld [vmem:[#allocation2 + $0x50] sm:$0xff]
        %v496 = vld [vmem:[#allocation2 + $0x58] sm:$0xff]
        %v497 = vld [vmem:[#allocation2 + $0x60] sm:$0xff]
        %v498 = vld [vmem:[#allocation2 + $0x68] sm:$0xff]
        %v499 = vld [vmem:[#allocation2 + $0x70] sm:$0xff]
        %v500 = vld [vmem:[#allocation2 + $0x78] sm:$0xff]
        %v501 = vld [vmem:[#allocation2 + $0x80] sm:$0xff]
        %v502 = vld [vmem:[#allocation2 + $0x88] sm:$0xff]
        %v503 = vld [vmem:[#allocation2 + $0x90] sm:$0xff]
        %v504 = vld [vmem:[#allocation2 + $0x98] sm:$0xff]
        %v505 = vld [vmem:[#allocation2 + $0xa0] sm:$0xff]
        %v506 = vld [vmem:[#allocation2 + $0xa8] sm:$0xff]
        %v507 = vld [vmem:[#allocation2 + $0xb0] sm:$0xff]
        %v508 = vld [vmem:[#allocation2 + $0xb8] sm:$0xff]
        %v509 = vld [vmem:[#allocation2 + $0xc0] sm:$0xff]
        %v510 = vld [vmem:[#allocation2 + $0xc8] sm:$0xff]
        %v511 = vld [vmem:[#allocation2 + $0xd0] sm:$0xff]
        %v512 = vpack.c.bf16 %v488, %v485
        %v513 = vpack.c.bf16 %v489, %v486
        %v514 = vpack.c.bf16 %v490, %v487
        %v515 = vpack.c.bf16 %v494, %v491
        %v516 = vpack.c.bf16 %v495, %v492
        %v517 = vpack.c.bf16 %v496, %v493
        %v518 = vpack.c.bf16 %v500, %v497
        %v519 = vpack.c.bf16 %v501, %v498
        %v520 = vpack.c.bf16 %v502, %v499
        %v521 = vpack.c.bf16 %v506, %v503
        %v522 = vpack.c.bf16 %v507, %v504
        %v523 = vpack.c.bf16 %v508, %v505
        %v524 = vpack.c.bf16 %v509, %v509
        %v525 = vpack.c.bf16 %v510, %v510
        %v526 = vpack.c.bf16 %v511, %v511
        %v527 = vld [vmem:[%s1] sm:$0xf]
        %v528 = vld [vmem:[%s2] sm:$0xff]
        %530 = vset.pattern.permute.xlu0 0
        %531 = vperm.xlu0 %530, %v528
        %v532 = vpop.permute.xlu0 %531
        %vm534 = vcmask 588800
        %v536 = vsel %vm534, %v527, 0
        %vm538 = vcmask 1043456
        %v540 = vsel %vm538, %v524, 0
        %v543 = vsel %vm538, %v525, 0
        %v546 = vsel %vm538, %v526, 0
        %548 = vmatpush.bf16.msra.mxu0 0
        %549 = vmatpush.bf16.msra.mxu0 0
        %550 = vmatpush.bf16.msra.mxu0 0
        %551 = vmatpush.bf16.msra.mxu0 %v540
        %552 = vmatpush.bf16.msra.mxu0 %v521
        %553 = vmatpush.bf16.msra.mxu0 %v518
        %554 = vmatpush.bf16.msra.mxu0 %v515
        %555 = vmatpush.bf16.msra.mxu0 %v512
        %556 = vmatmul.bf16.gmra.mxu0 %v536
        %v557 = vpop.f32.mrf.mxu0
        %v558 = vadd.f32 %v532, %v557
        %v559 = vpop.f32.mrf.mxu0
        %560 = vdwg.mxu0
        %561 = vmatpush.bf16.msra.mxu0 0
        %562 = vmatpush.bf16.msra.mxu0 0
        %563 = vmatpush.bf16.msra.mxu0 0
        %564 = vmatpush.bf16.msra.mxu0 %v543
        %565 = vmatpush.bf16.msra.mxu0 %v522
        %566 = vmatpush.bf16.msra.mxu0 %v519
        %567 = vmatpush.bf16.msra.mxu0 %v516
        %568 = vmatpush.bf16.msra.mxu0 %v513
        %569 = vmatmul.bf16.gmra.mxu0 %v536
        %v570 = vpop.f32.mrf.mxu0
        %v571 = vadd.f32 %v532, %v570
        %v572 = vpop.f32.mrf.mxu0
        %573 = vdwg.mxu0
        %574 = vmatpush.bf16.msra.mxu0 0
        %575 = vmatpush.bf16.msra.mxu0 0
        %576 = vmatpush.bf16.msra.mxu0 0
        %577 = vmatpush.bf16.msra.mxu0 %v546
        %578 = vmatpush.bf16.msra.mxu0 %v523
        %579 = vmatpush.bf16.msra.mxu0 %v520
        %580 = vmatpush.bf16.msra.mxu0 %v517
        %581 = vmatpush.bf16.msra.mxu0 %v514
        %582 = vmatmul.bf16.gmra.mxu0 %v536
        %v583 = vpop.f32.mrf.mxu0
        %v584 = vadd.f32 %v532, %v583
        %v585 = vpop.f32.mrf.mxu0
        %586 = vdwg.mxu0
        %v587 = vmax.f32 %v558, 0.0
        %v588 = vmax.f32 %v571, 0.0
        %v589 = vmax.f32 %v584, 0.0
        %v590 = vld [vmem:[%s5] sm:$0x7]
        %v592 = vperm.slane %v590, 0
        %v593 = vperm.slane %v590, 1
        %v594 = vperm.slane %v590, 2
        %v598 = vmul.f32 %v587, %v592
        %v599 = vmul.f32 %v588, %v593
        %v600 = vmul.f32 %v589, %v594
        %601 = vst [vmem:[#allocation3] sm:$0xff] 0.0
        %602 = vst [vmem:[#allocation3 + $0x20] sm:$0xff] 0.0
        %603 = vst [vmem:[#allocation3 + $0x8] sm:$0xff] %v598
        %604 = vst [vmem:[#allocation3 + $0x10] sm:$0xff] %v599
        %605 = vst [vmem:[#allocation3 + $0x18] sm:$0xff] %v600
        %v606 = vld [vmem:[#allocation3] sm:$0xff]
        %v607 = vld [vmem:[#allocation3 + $0x8] sm:$0xff]
        %v608 = vld [vmem:[#allocation3 + $0x10] sm:$0xff]
        %v609 = vld [vmem:[#allocation3 + $0x18] sm:$0xff]
        %614 = vrot.lane.b32.xlu0 %v606, 19
        %v615 = vpop.permute.xlu0 %614
        %616 = vrot.lane.b32.xlu0 %v607, 19
        %v617 = vpop.permute.xlu0 %616
        %618 = vrot.lane.b32.xlu0 %v608, 19
        %v619 = vpop.permute.xlu0 %618
        %620 = vrot.lane.b32.xlu0 %v609, 19
        %v621 = vpop.permute.xlu0 %620
        %v622 = vsel %vm287, %v615, %v617
        %v623 = vsel %vm287, %v617, %v619
        %v624 = vsel %vm287, %v619, %v621
        %628 = vst [vmem:[#allocation2] sm:$0xff] %v622
        %629 = vst [vmem:[#allocation2 + $0x8] sm:$0xff] %v623
        %630 = vst [vmem:[#allocation2 + $0x10] sm:$0xff] %v624
        %v631 = vld [vmem:[#allocation3] sm:$0xff]
        %v632 = vld [vmem:[#allocation3 + $0x8] sm:$0xff]
        %v633 = vld [vmem:[#allocation3 + $0x10] sm:$0xff]
        %v634 = vld [vmem:[#allocation3 + $0x18] sm:$0xff]
        %639 = vrot.lane.b32.xlu0 %v631, 18
        %v640 = vpop.permute.xlu0 %639
        %641 = vrot.lane.b32.xlu0 %v632, 18
        %v642 = vpop.permute.xlu0 %641
        %643 = vrot.lane.b32.xlu0 %v633, 18
        %v644 = vpop.permute.xlu0 %643
        %645 = vrot.lane.b32.xlu0 %v634, 18
        %v646 = vpop.permute.xlu0 %645
        %v647 = vsel %vm313, %v640, %v642
        %v648 = vsel %vm313, %v642, %v644
        %v649 = vsel %vm313, %v644, %v646
        %653 = vst [vmem:[#allocation2 + $0x18] sm:$0xff] %v647
        %654 = vst [vmem:[#allocation2 + $0x20] sm:$0xff] %v648
        %655 = vst [vmem:[#allocation2 + $0x28] sm:$0xff] %v649
        %v656 = vld [vmem:[#allocation3] sm:$0xff]
        %v657 = vld [vmem:[#allocation3 + $0x8] sm:$0xff]
        %v658 = vld [vmem:[#allocation3 + $0x10] sm:$0xff]
        %v659 = vld [vmem:[#allocation3 + $0x18] sm:$0xff]
        %664 = vrot.lane.b32.xlu0 %v656, 17
        %v665 = vpop.permute.xlu0 %664
        %666 = vrot.lane.b32.xlu0 %v657, 17
        %v667 = vpop.permute.xlu0 %666
        %668 = vrot.lane.b32.xlu0 %v658, 17
        %v669 = vpop.permute.xlu0 %668
        %670 = vrot.lane.b32.xlu0 %v659, 17
        %v671 = vpop.permute.xlu0 %670
        %v672 = vsel %vm339, %v665, %v667
        %v673 = vsel %vm339, %v667, %v669
        %v674 = vsel %vm339, %v669, %v671
        %678 = vst [vmem:[#allocation2 + $0x30] sm:$0xff] %v672
        %679 = vst [vmem:[#allocation2 + $0x38] sm:$0xff] %v673
        %680 = vst [vmem:[#allocation2 + $0x40] sm:$0xff] %v674
        %v681 = vld [vmem:[#allocation3] sm:$0xff]
        %v682 = vld [vmem:[#allocation3 + $0x8] sm:$0xff]
        %v683 = vld [vmem:[#allocation3 + $0x10] sm:$0xff]
        %v684 = vld [vmem:[#allocation3 + $0x18] sm:$0xff]
        %689 = vrot.lane.b32.xlu0 %v681, 1
        %v690 = vpop.permute.xlu0 %689
        %691 = vrot.lane.b32.xlu0 %v682, 1
        %v692 = vpop.permute.xlu0 %691
        %693 = vrot.lane.b32.xlu0 %v683, 1
        %v694 = vpop.permute.xlu0 %693
        %695 = vrot.lane.b32.xlu0 %v684, 1
        %v696 = vpop.permute.xlu0 %695
        %v697 = vsel %vm365, %v690, %v692
        %v698 = vsel %vm365, %v692, %v694
        %v699 = vsel %vm365, %v694, %v696
        %703 = vst [vmem:[#allocation2 + $0x48] sm:$0xff] %v697
        %704 = vst [vmem:[#allocation2 + $0x50] sm:$0xff] %v698
        %705 = vst [vmem:[#allocation2 + $0x58] sm:$0xff] %v699
        %v706 = vld [vmem:[#allocation3 + $0x8] sm:$0xff]
        %v707 = vld [vmem:[#allocation3 + $0x10] sm:$0xff]
        %v708 = vld [vmem:[#allocation3 + $0x18] sm:$0xff]
        %709 = vst [vmem:[#allocation2 + $0x60] sm:$0xff] %v706
        %710 = vst [vmem:[#allocation2 + $0x68] sm:$0xff] %v707
        %711 = vst [vmem:[#allocation2 + $0x70] sm:$0xff] %v708
        %v712 = vld [vmem:[#allocation3 + $0x8] sm:$0xff]
        %v713 = vld [vmem:[#allocation3 + $0x10] sm:$0xff]
        %v714 = vld [vmem:[#allocation3 + $0x18] sm:$0xff]
        %v715 = vld [vmem:[#allocation3 + $0x20] sm:$0xff]
        %720 = vrot.lane.b32.xlu0 %v712, 127
        %v721 = vpop.permute.xlu0 %720
        %722 = vrot.lane.b32.xlu0 %v713, 127
        %v723 = vpop.permute.xlu0 %722
        %724 = vrot.lane.b32.xlu0 %v714, 127
        %v725 = vpop.permute.xlu0 %724
        %726 = vrot.lane.b32.xlu0 %v715, 127
        %v727 = vpop.permute.xlu0 %726
        %v728 = vsel %vm397, %v721, %v723
        %v729 = vsel %vm397, %v723, %v725
        %v730 = vsel %vm397, %v725, %v727
        %734 = vst [vmem:[#allocation2 + $0x78] sm:$0xff] %v728
        %735 = vst [vmem:[#allocation2 + $0x80] sm:$0xff] %v729
        %736 = vst [vmem:[#allocation2 + $0x88] sm:$0xff] %v730
        %v737 = vld [vmem:[#allocation3 + $0x8] sm:$0xff]
        %v738 = vld [vmem:[#allocation3 + $0x10] sm:$0xff]
        %v739 = vld [vmem:[#allocation3 + $0x18] sm:$0xff]
        %v740 = vld [vmem:[#allocation3 + $0x20] sm:$0xff]
        %745 = vrot.lane.b32.xlu0 %v737, 111
        %v746 = vpop.permute.xlu0 %745
        %747 = vrot.lane.b32.xlu0 %v738, 111
        %v748 = vpop.permute.xlu0 %747
        %749 = vrot.lane.b32.xlu0 %v739, 111
        %v750 = vpop.permute.xlu0 %749
        %751 = vrot.lane.b32.xlu0 %v740, 111
        %v752 = vpop.permute.xlu0 %751
        %v753 = vsel %vm423, %v746, %v748
        %v754 = vsel %vm423, %v748, %v750
        %v755 = vsel %vm423, %v750, %v752
        %759 = vst [vmem:[#allocation2 + $0x90] sm:$0xff] %v753
        %760 = vst [vmem:[#allocation2 + $0x98] sm:$0xff] %v754
        %761 = vst [vmem:[#allocation2 + $0xa0] sm:$0xff] %v755
        %v762 = vld [vmem:[#allocation3 + $0x8] sm:$0xff]
        %v763 = vld [vmem:[#allocation3 + $0x10] sm:$0xff]
        %v764 = vld [vmem:[#allocation3 + $0x18] sm:$0xff]
        %v765 = vld [vmem:[#allocation3 + $0x20] sm:$0xff]
        %770 = vrot.lane.b32.xlu0 %v762, 110
        %v771 = vpop.permute.xlu0 %770
        %772 = vrot.lane.b32.xlu0 %v763, 110
        %v773 = vpop.permute.xlu0 %772
        %774 = vrot.lane.b32.xlu0 %v764, 110
        %v775 = vpop.permute.xlu0 %774
        %776 = vrot.lane.b32.xlu0 %v765, 110
        %v777 = vpop.permute.xlu0 %776
        %v778 = vsel %vm449, %v771, %v773
        %v779 = vsel %vm449, %v773, %v775
        %v780 = vsel %vm449, %v775, %v777
        %784 = vst [vmem:[#allocation2 + $0xa8] sm:$0xff] %v778
        %785 = vst [vmem:[#allocation2 + $0xb0] sm:$0xff] %v779
        %786 = vst [vmem:[#allocation2 + $0xb8] sm:$0xff] %v780
        %v787 = vld [vmem:[#allocation3 + $0x8] sm:$0xff]
        %v788 = vld [vmem:[#allocation3 + $0x10] sm:$0xff]
        %v789 = vld [vmem:[#allocation3 + $0x18] sm:$0xff]
        %v790 = vld [vmem:[#allocation3 + $0x20] sm:$0xff]
        %795 = vrot.lane.b32.xlu0 %v787, 109
        %v796 = vpop.permute.xlu0 %795
        %797 = vrot.lane.b32.xlu0 %v788, 109
        %v798 = vpop.permute.xlu0 %797
        %799 = vrot.lane.b32.xlu0 %v789, 109
        %v800 = vpop.permute.xlu0 %799
        %801 = vrot.lane.b32.xlu0 %v790, 109
        %v802 = vpop.permute.xlu0 %801
        %v803 = vsel %vm475, %v796, %v798
        %v804 = vsel %vm475, %v798, %v800
        %v805 = vsel %vm475, %v800, %v802
        %809 = vst [vmem:[#allocation2 + $0xc0] sm:$0xff] %v803
        %810 = vst [vmem:[#allocation2 + $0xc8] sm:$0xff] %v804
        %811 = vst [vmem:[#allocation2 + $0xd0] sm:$0xff] %v805
        %v812 = vld [vmem:[%s240 + $0x8] sm:$0xff]
        %v813 = vld [vmem:[%s240 + $0x10] sm:$0xff]
        %v814 = vld [vmem:[%s240 + $0x18] sm:$0xff]
        %v815 = vld [vmem:[#allocation2] sm:$0xff]
        %v816 = vld [vmem:[#allocation2 + $0x8] sm:$0xff]
        %v817 = vld [vmem:[#allocation2 + $0x10] sm:$0xff]
        %v818 = vld [vmem:[#allocation2 + $0x18] sm:$0xff]
        %v819 = vld [vmem:[#allocation2 + $0x20] sm:$0xff]
        %v820 = vld [vmem:[#allocation2 + $0x28] sm:$0xff]
        %v821 = vld [vmem:[#allocation2 + $0x30] sm:$0xff]
        %v822 = vld [vmem:[#allocation2 + $0x38] sm:$0xff]
        %v823 = vld [vmem:[#allocation2 + $0x40] sm:$0xff]
        %v824 = vld [vmem:[#allocation2 + $0x48] sm:$0xff]
        %v825 = vld [vmem:[#allocation2 + $0x50] sm:$0xff]
        %v826 = vld [vmem:[#allocation2 + $0x58] sm:$0xff]
        %v827 = vld [vmem:[#allocation2 + $0x60] sm:$0xff]
        %v828 = vld [vmem:[#allocation2 + $0x68] sm:$0xff]
        %v829 = vld [vmem:[#allocation2 + $0x70] sm:$0xff]
        %v830 = vld [vmem:[#allocation2 + $0x78] sm:$0xff]
        %v831 = vld [vmem:[#allocation2 + $0x80] sm:$0xff]
        %v832 = vld [vmem:[#allocation2 + $0x88] sm:$0xff]
        %v833 = vld [vmem:[#allocation2 + $0x90] sm:$0xff]
        %v834 = vld [vmem:[#allocation2 + $0x98] sm:$0xff]
        %v835 = vld [vmem:[#allocation2 + $0xa0] sm:$0xff]
        %v836 = vld [vmem:[#allocation2 + $0xa8] sm:$0xff]
        %v837 = vld [vmem:[#allocation2 + $0xb0] sm:$0xff]
        %v838 = vld [vmem:[#allocation2 + $0xb8] sm:$0xff]
        %v839 = vld [vmem:[#allocation2 + $0xc0] sm:$0xff]
        %v840 = vld [vmem:[#allocation2 + $0xc8] sm:$0xff]
        %v841 = vld [vmem:[#allocation2 + $0xd0] sm:$0xff]
        %v842 = vpack.c.bf16 %v818, %v815
        %v843 = vpack.c.bf16 %v819, %v816
        %v844 = vpack.c.bf16 %v820, %v817
        %v845 = vpack.c.bf16 %v824, %v821
        %v846 = vpack.c.bf16 %v825, %v822
        %v847 = vpack.c.bf16 %v826, %v823
        %v848 = vpack.c.bf16 %v830, %v827
        %v849 = vpack.c.bf16 %v831, %v828
        %v850 = vpack.c.bf16 %v832, %v829
        %v851 = vpack.c.bf16 %v836, %v833
        %v852 = vpack.c.bf16 %v837, %v834
        %v853 = vpack.c.bf16 %v838, %v835
        %v854 = vpack.c.bf16 %v839, %v839
        %v855 = vpack.c.bf16 %v840, %v840
        %v856 = vpack.c.bf16 %v841, %v841
        %v857 = vld [vmem:[%s3] sm:$0xf]
        %v858 = vld [vmem:[%s4] sm:$0xff]
        %860 = vset.pattern.permute.xlu0 0
        %861 = vperm.xlu0 %860, %v858
        %v862 = vpop.permute.xlu0 %861
        %v865 = vsel %vm534, %v857, 0
        %v868 = vsel %vm538, %v854, 0
        %v871 = vsel %vm538, %v855, 0
        %v874 = vsel %vm538, %v856, 0
        %876 = vmatpush.bf16.msra.mxu0 0
        %877 = vmatpush.bf16.msra.mxu0 0
        %878 = vmatpush.bf16.msra.mxu0 0
        %879 = vmatpush.bf16.msra.mxu0 %v868
        %880 = vmatpush.bf16.msra.mxu0 %v851
        %881 = vmatpush.bf16.msra.mxu0 %v848
        %882 = vmatpush.bf16.msra.mxu0 %v845
        %883 = vmatpush.bf16.msra.mxu0 %v842
        %884 = vmatmul.bf16.gmra.mxu0 %v865
        %v885 = vpop.f32.mrf.mxu0
        %v886 = vadd.f32 %v862, %v885
        %v887 = vpop.f32.mrf.mxu0
        %888 = vdwg.mxu0
        %889 = vmatpush.bf16.msra.mxu0 0
        %890 = vmatpush.bf16.msra.mxu0 0
        %891 = vmatpush.bf16.msra.mxu0 0
        %892 = vmatpush.bf16.msra.mxu0 %v871
        %893 = vmatpush.bf16.msra.mxu0 %v852
        %894 = vmatpush.bf16.msra.mxu0 %v849
        %895 = vmatpush.bf16.msra.mxu0 %v846
        %896 = vmatpush.bf16.msra.mxu0 %v843
        %897 = vmatmul.bf16.gmra.mxu0 %v865
        %v898 = vpop.f32.mrf.mxu0
        %v899 = vadd.f32 %v862, %v898
        %v900 = vpop.f32.mrf.mxu0
        %901 = vdwg.mxu0
        %902 = vmatpush.bf16.msra.mxu0 0
        %903 = vmatpush.bf16.msra.mxu0 0
        %904 = vmatpush.bf16.msra.mxu0 0
        %905 = vmatpush.bf16.msra.mxu0 %v874
        %906 = vmatpush.bf16.msra.mxu0 %v853
        %907 = vmatpush.bf16.msra.mxu0 %v850
        %908 = vmatpush.bf16.msra.mxu0 %v847
        %909 = vmatpush.bf16.msra.mxu0 %v844
        %910 = vmatmul.bf16.gmra.mxu0 %v865
        %v911 = vpop.f32.mrf.mxu0
        %v912 = vadd.f32 %v862, %v911
        %v913 = vpop.f32.mrf.mxu0
        %914 = vdwg.mxu0
        %v915 = vadd.f32 %v812, %v886
        %v916 = vadd.f32 %v813, %v899
        %v917 = vadd.f32 %v814, %v912
        %v918 = vmax.f32 %v915, 0.0
        %v919 = vmax.f32 %v916, 0.0
        %v920 = vmax.f32 %v917, 0.0
        %921 = vst [vmem:[%s269] sm:$0xff] %v918
        %922 = vst [vmem:[%s269 + $0x8] sm:$0xff] %v919
        %923 = vst [vmem:[%s269 + $0x10] sm:$0xff] %v920
        %s924 = sand.u32 %s162, 1
        %s925 = scalar_lea.sflag [#allocation6], %s924
        %s926 = sand.u32 %s162, 1
        %s927 = smul.addr %s926, 24
        %s928 = scalar_lea.vmem [#allocation7], %s927
        // Predicated region
        $region49: #{tpu_custom_call.1} parent=43 // pred_check
          %p929 = pneg %p172
        $region50: #{tpu_custom_call.1} parent=43 // pred_check_branch
          %931 = sbr.rel (%p929) target = $region52
        $region51: #{tpu_custom_call.1} parent=43 // pred_region
          %933 = vsyncadd %s925, 0
          %s934 = smul.addr %s23, 3
          %s935 = smul.addr %s934, 8
          %s936 = scalar_lea.hbm %s6, %s935
          %s938 = sshll.u32 %s928, 4
          %s939 = int_to_ptr.vmem [resolvable:$true] %s938
          %s940 = sshll.u32 %s936, 4
          %s941 = int_to_ptr.hbm [resolvable:$true] %s940
          %943 = dma.vmem_to_hbm [thread:$0]  %s939, 384, %s941, %s925
        $region52: #{tpu_custom_call.1} parent=43 // pred_fallthru
          _
      $region44: #{tpu_custom_call.1} parent=5 // pred_fallthru
        _
      %p944 = scmp.le.s32.totalorder 2, %s18
      // Predicated region
      $region53: #{tpu_custom_call.1} parent=5 // pred_check
        %p945 = pneg %p944
      $region54: #{tpu_custom_call.1} parent=5 // pred_check_branch
        %947 = sbr.rel (%p945) target = $region56
      $region55: #{tpu_custom_call.1} parent=5 // pred_region
        %s948 = ssub.s32 %s18, 2
        // Predicated region
        $region57: #{tpu_custom_call.1} parent=55 // pred_check
          %p949 = pneg %p178
        $region58: #{tpu_custom_call.1} parent=55 // pred_check_branch
          %951 = sbr.rel (%p949) target = $region60
        $region59: #{tpu_custom_call.1} parent=55 // pred_region
          %s952 = sand.u32 %s163, 1
          %s953 = scalar_lea.sflag [#allocation6], %s952
          %s954 = sand.u32 %s163, 1
          %s955 = smul.addr %s954, 24
          %s956 = scalar_lea.vmem [#allocation7], %s955
          %958 = dma.done %s953, 384
        $region60: #{tpu_custom_call.1} parent=55 // pred_fallthru
          _
      $region56: #{tpu_custom_call.1} parent=5 // pred_fallthru
        _
    $region6: #{tpu_custom_call.1} parent=1 // loop_footer
      %s22 = sadd.s32 1, %s18
    $region7: #{tpu_custom_call.1} parent=1 // loop_footer_branch
      %17 = sbr.rel target = $region3
    $region8: #{tpu_custom_call.1} parent=1 // loop_exit
      _
    %959 = vsyncpa [#allocation5], 1
    %s960 = scalar_lea.sflag [#allocation5], 1
    %961 = vsyncpa %s960, 1
    %962 = vsyncpa [#allocation6], 1
    %s963 = scalar_lea.sflag [#allocation6], 1
    %964 = vsyncpa %s963, 1

</llo_original>
